<compile_context>
chip_gen: v7x
topology: tpu7x:2x2x1
jax: 0.10.0
libtpu: 0.0.40
codegen_flags: <defaults>
</compile_context>

<pallas_src>
import functools

import jax
import jax.numpy as jnp
from jax.experimental import pallas as pl
from jax.experimental.pallas import tpu as pltpu

LANES = 128                       # TPU vreg lane width
ACC_SUBLANES = 8                  # (8, 128) f32 accumulator == one vreg
ELEMWISE_MAX_BLOCK_ROWS = 2048    # 1 MiB/buffer: safe under every scoped-VMEM default
NUM_CORE_GROUPS = 2               # dual-TC split on v7x; no-op (serial) on 1-TC chips


def _f32(x):
    return x if x.dtype == jnp.float32 else x.astype(jnp.float32)


@functools.lru_cache(maxsize=None)
def _reduce_cfg():
    """(max_block_rows, vmem_limit_bytes) for the streaming-reduce paths, per chip."""
    kind = ""
    try:
        kind = jax.devices()[0].device_kind.lower()
    except Exception:
        pass
    if "v7" in kind:
        # 4 MiB/buffer: ~88% HBM duty cycle at ~3.2 TB/s; stays well under the
        # 64 MiB physical VMEM per TC even with elementwise temporaries.
        return 8192, 56 * 1024 * 1024
    if "v6" in kind:
        # 6 MiB/buffer: <5% per-step overhead at ~1.4 TB/s; needs the 32 MiB
        # scoped default raised (128 MiB physical, plenty of headroom).
        return 12288, 96 * 1024 * 1024
    # v5e (16 MiB scoped default) and unknown chips: 1 MiB/buffer already puts
    # the 0.35 us/step overhead under ~15%; bigger blocks buy little there.
    return 2048, None


def _sublane_multiple(*dtypes):
    """Second-to-last block dim must respect packed-dtype tiling (8/16/32 sublanes)."""
    m = 8
    for dt in dtypes:
        item = jnp.dtype(dt).itemsize
        m = max(m, 8 * max(1, 4 // max(item, 1)))
    return m


def _pick_block_rows(rows, max_rows, sublane):
    max_rows = max(sublane, (max_rows // sublane) * sublane)
    if rows <= max_rows:
        return rows                # one full-dim block: legal for any rows / dtype
    return max_rows


def _to_2d_aligned(x):
    """Flatten to a lane-dense (rows, 128) slab plus an optional <128-elem tail
    (avoids a full-tensor pad copy for lane-unaligned totals)."""
    flat = x.reshape(-1)
    n = flat.shape[0]
    n_main = (n // LANES) * LANES
    rows = n_main // LANES
    if n_main == n:
        return flat.reshape(rows, LANES), None
    return flat[:n_main].reshape(rows, LANES), flat[n_main:]


def _reduce_grid(rows, block_rows):
    num_blocks = pl.cdiv(rows, block_rows)
    cores = NUM_CORE_GROUPS if num_blocks >= NUM_CORE_GROUPS else 1
    steps = pl.cdiv(num_blocks, cores)
    return num_blocks, cores, steps


# ------------------------------- kernels ------------------------------------


def _accumulate(acc_ref, vals, block_rows):
    """Fold a (block_rows, LANES) f32 value into the (8, LANES) accumulator ref.
    Multiple-of-8 blocks use only VPU adds; the tiny ragged single-block case
    takes one sublane (XLU) reduce instead."""
    if block_rows % ACC_SUBLANES == 0:
        acc_ref[...] += vals.reshape(
            block_rows // ACC_SUBLANES, ACC_SUBLANES, LANES).sum(axis=0)
    else:
        acc_ref[0:1, :] += vals.sum(axis=0, keepdims=True)


def _sum_sq_kernel(p_ref, t_ref, acc_ref, *, rows, block_rows,
                   steps_per_core, need_mask):
    """Per core-group partial sums of (p - t)^2 into the resident (8,128) output."""
    i = pl.program_id(1)

    @pl.when(i == 0)
    def _():
        acc_ref[...] = jnp.zeros_like(acc_ref)

    d = _f32(p_ref[...]) - _f32(t_ref[...])
    sq = d * d
    if need_mask:
        blk = pl.program_id(0) * steps_per_core + i
        row_ids = blk * block_rows + jax.lax.broadcasted_iota(jnp.int32, sq.shape, 0)
        sq = jnp.where(row_ids < rows, sq, 0.0)
    _accumulate(acc_ref, sq, block_rows)


def _sum_sq_weighted_kernel(p_ref, t_ref, w_ref, sq_acc_ref, w_acc_ref, *,
                            rows, block_rows, steps_per_core, need_mask):
    """Per core-group partial sums of w*(p-t)^2 and of w."""
    i = pl.program_id(1)

    @pl.when(i == 0)
    def _():
        sq_acc_ref[...] = jnp.zeros_like(sq_acc_ref)
        w_acc_ref[...] = jnp.zeros_like(w_acc_ref)

    d = _f32(p_ref[...]) - _f32(t_ref[...])
    w = _f32(w_ref[...])
    if need_mask:
        blk = pl.program_id(0) * steps_per_core + i
        row_ids = blk * block_rows + jax.lax.broadcasted_iota(jnp.int32, d.shape, 0)
        in_bounds = row_ids < rows
        d = jnp.where(in_bounds, d, 0.0)
        w = jnp.where(in_bounds, w, 0.0)
    _accumulate(sq_acc_ref, d * d * w, block_rows)
    _accumulate(w_acc_ref, w, block_rows)


def _elemwise_kernel(p_ref, t_ref, o_ref, *, scale):
    d = _f32(p_ref[...]) - _f32(t_ref[...])
    out = d * d
    if scale != 1.0:
        out = out * scale
    o_ref[...] = out.astype(o_ref.dtype)


def _elemwise_weighted_kernel(p_ref, t_ref, w_ref, o_ref, *, scale):
    d = _f32(p_ref[...]) - _f32(t_ref[...])
    out = d * d * _f32(w_ref[...])
    if scale != 1.0:
        out = out * scale
    o_ref[...] = out.astype(o_ref.dtype)


# --------------------------- reduce wrappers ---------------------------------


def _reduce_sum_sq(p2, t2, rows, cap=None):
    max_rows, vmem_limit = _reduce_cfg()
    if cap is not None:
        max_rows = min(max_rows, cap)
    block_rows = _pick_block_rows(rows, max_rows, _sublane_multiple(p2.dtype, t2.dtype))
    num_blocks, cores, steps = _reduce_grid(rows, block_rows)
    need_mask = (cores * steps * block_rows) != rows

    def in_map(c, i):
        # Clamp so fully-out-of-range steps re-read a valid block (masked to 0).
        return (jnp.minimum(c * steps + i, num_blocks - 1), 0)

    tile = pl.BlockSpec((block_rows, LANES), in_map)
    kernel = functools.partial(_sum_sq_kernel, rows=rows, block_rows=block_rows,
                               steps_per_core=steps, need_mask=need_mask)
    cp_kwargs = dict(dimension_semantics=("parallel", "arbitrary"))
    if vmem_limit is not None:
        cp_kwargs["vmem_limit_bytes"] = vmem_limit
    acc = pl.pallas_call(
        kernel,
        out_shape=jax.ShapeDtypeStruct((cores * ACC_SUBLANES, LANES), jnp.float32),
        grid=(cores, steps),
        in_specs=[tile, tile],
        out_specs=pl.BlockSpec((ACC_SUBLANES, LANES), lambda c, i: (c, 0)),
        compiler_params=pltpu.CompilerParams(**cp_kwargs),
    )(p2, t2)
    return jnp.sum(acc)


def _reduce_sum_sq_weighted(p2, t2, w2, rows, cap=None):
    max_rows, vmem_limit = _reduce_cfg()
    if cap is not None:
        max_rows = min(max_rows, cap)
    block_rows = _pick_block_rows(
        rows, max_rows, _sublane_multiple(p2.dtype, t2.dtype, w2.dtype))
    num_blocks, cores, steps = _reduce_grid(rows, block_rows)
    need_mask = (cores * steps * block_rows) != rows

    def in_map(c, i):
        return (jnp.minimum(c * steps + i, num_blocks - 1), 0)

    tile = pl.BlockSpec((block_rows, LANES), in_map)
    out_spec = pl.BlockSpec((ACC_SUBLANES, LANES), lambda c, i: (c, 0))
    out_shape = jax.ShapeDtypeStruct((cores * ACC_SUBLANES, LANES), jnp.float32)
    kernel = functools.partial(_sum_sq_weighted_kernel, rows=rows,
                               block_rows=block_rows, steps_per_core=steps,
                               need_mask=need_mask)
    cp_kwargs = dict(dimension_semantics=("parallel", "arbitrary"))
    if vmem_limit is not None:
        cp_kwargs["vmem_limit_bytes"] = vmem_limit
    sq_acc, w_acc = pl.pallas_call(
        kernel,
        out_shape=(out_shape, out_shape),
        grid=(cores, steps),
        in_specs=[tile, tile, tile],
        out_specs=(out_spec, out_spec),
        compiler_params=pltpu.CompilerParams(**cp_kwargs),
    )(p2, t2, w2)
    return jnp.sum(sq_acc), jnp.sum(w_acc)


# --------------------------- elementwise wrapper ------------------------------


def _elementwise_sq(pred, target, weight, scale, cap=None):
    shape, out_dtype = pred.shape, pred.dtype
    p2, p_tail = _to_2d_aligned(pred)
    t2, t_tail = _to_2d_aligned(target)
    w2 = w_tail = None
    if weight is not None:
        w2, w_tail = _to_2d_aligned(weight)
    rows = p2.shape[0]

    out_main = None
    if rows:
        max_rows = ELEMWISE_MAX_BLOCK_ROWS if cap is None else min(ELEMWISE_MAX_BLOCK_ROWS, cap)
        dtypes = (pred.dtype, target.dtype) + (() if weight is None else (weight.dtype,))
        block_rows = _pick_block_rows(rows, max_rows, _sublane_multiple(*dtypes))
        tile = pl.BlockSpec((block_rows, LANES), lambda i: (i, 0))
        if weight is None:
            kernel = functools.partial(_elemwise_kernel, scale=scale)
            args, in_specs = (p2, t2), [tile, tile]
        else:
            kernel = functools.partial(_elemwise_weighted_kernel, scale=scale)
            args, in_specs = (p2, t2, w2), [tile, tile, tile]
        out_main = pl.pallas_call(
            kernel,
            out_shape=jax.ShapeDtypeStruct((rows, LANES), out_dtype),
            grid=(pl.cdiv(rows, block_rows),),
            in_specs=in_specs,
            out_specs=tile,
            compiler_params=pltpu.CompilerParams(dimension_semantics=("parallel",)),
        )(*args)

    if p_tail is None:
        return out_main.reshape(shape)

    dt = p_tail.astype(jnp.float32) - t_tail.astype(jnp.float32)
    tail_out = dt * dt
    if weight is not None:
        tail_out = tail_out * w_tail.astype(jnp.float32)
    if scale != 1.0:
        tail_out = tail_out * scale
    tail_out = tail_out.astype(out_dtype)
    if out_main is None:
        return tail_out.reshape(shape)
    return jnp.concatenate([out_main.reshape(-1), tail_out]).reshape(shape)


# --------------------------------- module ------------------------------------


class MSELossPallas:
    """JAX/Pallas port of basicsr MSELoss (loss_weight * weighted MSE)."""

    def __init__(self, loss_weight=1.0, reduction='mean', block_rows_cap=None):
        if reduction not in ('none', 'mean', 'sum'):
            raise ValueError(f'Unsupported reduction mode: {reduction}.')
        self.loss_weight = float(loss_weight)
        self.reduction = reduction
        self._block_rows_cap = block_rows_cap   # test hook: force small blocks

    def __call__(self, pred, target, weight=None):
        if weight is not None and weight.shape != pred.shape:
            # basicsr allows a C==1 weight; broadcasting keeps denominator
            # semantics (broadcast_weight.sum() == weight.sum() * C).
            # TODO(synk): C==1 weights still materialize the broadcast in HBM; a
            # channel-agnostic weight index_map would avoid the extra traffic.
            weight = jnp.broadcast_to(weight, pred.shape)

        if self.reduction == 'none':
            return _elementwise_sq(pred, target, weight, self.loss_weight,
                                   cap=self._block_rows_cap)

        p2, p_tail = _to_2d_aligned(pred)
        t2, t_tail = _to_2d_aligned(target)
        rows = p2.shape[0]

        if weight is None:
            total = (_reduce_sum_sq(p2, t2, rows, cap=self._block_rows_cap)
                     if rows else jnp.zeros((), jnp.float32))
            if p_tail is not None:
                dt = p_tail.astype(jnp.float32) - t_tail.astype(jnp.float32)
                total = total + jnp.sum(dt * dt)
            if self.reduction == 'mean':
                total = total / pred.size
            return (self.loss_weight * total).astype(pred.dtype)

        w2, w_tail = _to_2d_aligned(weight)
        if rows:
            wsq, wsum = _reduce_sum_sq_weighted(p2, t2, w2, rows,
                                                cap=self._block_rows_cap)
        else:
            wsq = jnp.zeros((), jnp.float32)
            wsum = jnp.zeros((), jnp.float32)
        if p_tail is not None:
            dt = p_tail.astype(jnp.float32) - t_tail.astype(jnp.float32)
            wt = w_tail.astype(jnp.float32)
            wsq = wsq + jnp.sum(wt * dt * dt)
            wsum = wsum + jnp.sum(wt)
        if self.reduction == 'sum':
            return (self.loss_weight * wsq).astype(pred.dtype)
        # basicsr weighted 'mean': loss.sum() / (weight.sum() + 1e-12)
        return (self.loss_weight * wsq / (wsum + 1e-12)).astype(pred.dtype)


# --------------------------------- main --------------------------------------


if __name__ == "__main__":
    key = jax.random.PRNGKey(0)
    k1, k2, k3 = jax.random.split(key, 3)

    N, C, H, W = 2, 4, 16, 16                    # NCHW, matching the PyTorch module
    pred = jax.random.normal(k1, (N, C, H, W), dtype=jnp.float32)
    target = jax.random.normal(k2, (N, C, H, W), dtype=jnp.float32)
    weight = jax.random.uniform(k3, (N, C, H, W), dtype=jnp.float32)

    # reduction='mean', no weight (default path)
    loss_mean = jax.block_until_ready(MSELossPallas(1.0, 'mean')(pred, target))
    assert jnp.allclose(loss_mean, jnp.mean((pred - target) ** 2), rtol=1e-5, atol=1e-6)

    # reduction='sum'
    loss_sum = jax.block_until_ready(MSELossPallas(0.5, 'sum')(pred, target))
    assert jnp.allclose(loss_sum, 0.5 * jnp.sum((pred - target) ** 2), rtol=1e-4, atol=1e-4)

    # reduction='none' with element-wise weight
    loss_none = jax.block_until_ready(MSELossPallas(1.0, 'none')(pred, target, weight))
    assert loss_none.shape == pred.shape
    assert jnp.allclose(loss_none, weight * (pred - target) ** 2, rtol=1e-5, atol=1e-6)

    # reduction='mean' with element-wise weight (basicsr weighted-mean semantics)
    loss_wmean = jax.block_until_ready(MSELossPallas(1.0, 'mean')(pred, target, weight))
    ref_wmean = jnp.sum(weight * (pred - target) ** 2) / jnp.sum(weight)
    assert jnp.allclose(loss_wmean, ref_wmean, rtol=1e-5, atol=1e-6)

    # lane-unaligned total: 128-aligned prefix kernel + jnp tail (no jnp.pad copy)
    ko1, ko2 = jax.random.split(k3)
    p_odd = jax.random.normal(ko1, (2, 3, 17, 16), dtype=jnp.float32)
    t_odd = jax.random.normal(ko2, (2, 3, 17, 16), dtype=jnp.float32)
    l_odd = jax.block_until_ready(MSELossPallas(1.0, 'mean')(p_odd, t_odd))
    assert jnp.allclose(l_odd, jnp.mean((p_odd - t_odd) ** 2), rtol=1e-5, atol=1e-6)
    l_odd_n = jax.block_until_ready(MSELossPallas(2.0, 'none')(p_odd, t_odd))
    assert jnp.allclose(l_odd_n, 2.0 * (p_odd - t_odd) ** 2, rtol=1e-5, atol=1e-6)
    # same input with tiny blocks: dual core-group grid + ragged masking + tail
    l_odd_s = jax.block_until_ready(
        MSELossPallas(1.0, 'sum', block_rows_cap=8)(p_odd, t_odd))
    assert jnp.allclose(l_odd_s, jnp.sum((p_odd - t_odd) ** 2), rtol=1e-4, atol=1e-3)

    # multi-block / dual core-group / clamped OOB step / ragged final block
    kb1, kb2, kb3 = jax.random.split(k1, 3)
    p_big = jax.random.normal(kb1, (2, 8, 72, 64), dtype=jnp.float32)
    t_big = jax.random.normal(kb2, (2, 8, 72, 64), dtype=jnp.float32)
    w_big = jax.random.uniform(kb3, (2, 8, 72, 64), dtype=jnp.float32)
    l_big = jax.block_until_ready(
        MSELossPallas(1.0, 'mean', block_rows_cap=128)(p_big, t_big))
    assert jnp.allclose(l_big, jnp.mean((p_big - t_big) ** 2), rtol=1e-5, atol=1e-6)
    l_big_w = jax.block_until_ready(
        MSELossPallas(1.0, 'mean', block_rows_cap=128)(p_big, t_big, w_big))
    ref_big_w = jnp.sum(w_big * (p_big - t_big) ** 2) / jnp.sum(w_big)
    assert jnp.allclose(l_big_w, ref_big_w, rtol=1e-4, atol=1e-5)
    # default per-chip block size on the same tensors
    l_big_d = jax.block_until_ready(MSELossPallas(1.0, 'sum')(p_big, t_big, w_big))
    assert jnp.allclose(l_big_d, jnp.sum(w_big * (p_big - t_big) ** 2),
                        rtol=1e-4, atol=1e-3)

    # bf16 inputs (packed-dtype sublane tiling), single- and multi-block
    p_bf, t_bf = pred.astype(jnp.bfloat16), target.astype(jnp.bfloat16)
    ref_bf = jnp.mean((p_bf.astype(jnp.float32) - t_bf.astype(jnp.float32)) ** 2)
    l_bf = jax.block_until_ready(MSELossPallas(1.0, 'mean')(p_bf, t_bf))
    assert jnp.allclose(l_bf.astype(jnp.float32), ref_bf, rtol=1e-2, atol=1e-3)
    pb_bf, tb_bf = p_big.astype(jnp.bfloat16), t_big.astype(jnp.bfloat16)
    ref_bf2 = jnp.mean((pb_bf.astype(jnp.float32) - tb_bf.astype(jnp.float32)) ** 2)
    l_bf2 = jax.block_until_ready(
        MSELossPallas(1.0, 'mean', block_rows_cap=128)(pb_bf, tb_bf))
    assert jnp.allclose(l_bf2.astype(jnp.float32), ref_bf2, rtol=1e-2, atol=1e-3)

    print("KERNEL_OK")
</pallas_src>

<mosaic_0001>
module attributes {stable_mosaic.version = 11 : i64} {
  func.func @_sum_sq_kernel(%arg0: i32, %arg1: i32, %arg2: memref<16x128xf32, #tpu.memory_space<vmem>>, %arg3: memref<16x128xf32, #tpu.memory_space<vmem>>, %arg4: memref<8x128xf32, #tpu.memory_space<vmem>>) attributes {dimension_semantics = [#tpu.dimension_semantics<parallel>, #tpu.dimension_semantics<arbitrary>], iteration_bounds = array<i64: 1, 1>, scalar_prefetch = 0 : i64, scratch_operands = 0 : i64, tpu.core_type = #tpu.core_type<tc>, window_params = [{transform_indices = @transform_0, window_bounds = array<i64: 16, 128>}, {transform_indices = @transform_1, window_bounds = array<i64: 16, 128>}, {transform_indices = @transform_2, window_bounds = array<i64: 8, 128>}]} {
    %c0_i32 = arith.constant 0 : i32
    %0 = arith.cmpi eq, %arg1, %c0_i32 : i32
    %1 = arith.extui %0 : i1 to i32
    %c0_i32_0 = arith.constant 0 : i32
    %2 = arith.cmpi ne, %1, %c0_i32_0 : i32
    scf.if %2 {
      %cst_8 = arith.constant 0.000000e+00 : f32
      %12 = vector.broadcast %cst_8 : f32 to vector<8x128xf32>
      %c0_9 = arith.constant 0 : index
      %c0_10 = arith.constant 0 : index
      %13 = vector.load %arg4[%c0_9, %c0_10] : memref<8x128xf32, #tpu.memory_space<vmem>>, vector<8x128xf32>
      tpu.vector_store %arg4[%c0_9, %c0_10], %12 {strides = array<i32>} : memref<8x128xf32, #tpu.memory_space<vmem>>, vector<8x128xf32>,
    } else {
    }
    %c0 = arith.constant 0 : index
    %c0_1 = arith.constant 0 : index
    %3 = vector.load %arg2[%c0, %c0_1] : memref<16x128xf32, #tpu.memory_space<vmem>>, vector<16x128xf32>
    %c0_2 = arith.constant 0 : index
    %c0_3 = arith.constant 0 : index
    %4 = vector.load %arg3[%c0_2, %c0_3] : memref<16x128xf32, #tpu.memory_space<vmem>>, vector<16x128xf32>
    %5 = arith.subf %3, %4 : vector<16x128xf32>
    %6 = arith.mulf %5, %5 : vector<16x128xf32>
    %c0_4 = arith.constant 0 : index
    %c0_5 = arith.constant 0 : index
    %7 = vector.load %arg4[%c0_4, %c0_5] : memref<8x128xf32, #tpu.memory_space<vmem>>, vector<8x128xf32>
    %8 = vector.shape_cast %6 : vector<16x128xf32> to vector<2x8x128xf32>
    %cst = arith.constant dense<0.000000e+00> : vector<8x128xf32>
    %9 = vector.multi_reduction <add>, %8, %cst [0] : vector<2x8x128xf32> to vector<8x128xf32>
    %10 = arith.addf %7, %9 : vector<8x128xf32>
    %c0_6 = arith.constant 0 : index
    %c0_7 = arith.constant 0 : index
    %11 = vector.load %arg4[%c0_6, %c0_7] : memref<8x128xf32, #tpu.memory_space<vmem>>, vector<8x128xf32>
    tpu.vector_store %arg4[%c0_6, %c0_7], %10 {strides = array<i32>} : memref<8x128xf32, #tpu.memory_space<vmem>>, vector<8x128xf32>,
    return
  }
  func.func @transform_0(%arg0: i32, %arg1: i32) -> (i32, i32) {
    %c1_i32 = arith.constant 1 : i32
    %0 = arith.muli %arg0, %c1_i32 : i32
    %1 = arith.addi %0, %arg1 : i32
    %c0_i32 = arith.constant 0 : i32
    %2 = arith.minsi %1, %c0_i32 : i32
    %c0_i32_0 = arith.constant 0 : i32
    %c0_i32_1 = arith.constant 0 : i32
    return %2, %c0_i32_0 : i32, i32
  }
  func.func @transform_1(%arg0: i32, %arg1: i32) -> (i32, i32) {
    %c1_i32 = arith.constant 1 : i32
    %0 = arith.muli %arg0, %c1_i32 : i32
    %1 = arith.addi %0, %arg1 : i32
    %c0_i32 = arith.constant 0 : i32
    %2 = arith.minsi %1, %c0_i32 : i32
    %c0_i32_0 = arith.constant 0 : i32
    %c0_i32_1 = arith.constant 0 : i32
    return %2, %c0_i32_0 : i32, i32
  }
  func.func @transform_2(%arg0: i32, %arg1: i32) -> (i32, i32) {
    %c0_i32 = arith.constant 0 : i32
    %c0_i32_0 = arith.constant 0 : i32
    return %arg0, %c0_i32 : i32, i32
  }
}

</mosaic_0001>

<llo_original>
// kernel: tpu_custom_call.1
$region0: #{tpu_custom_call.1}
  #allocation0 [shape = 'u32[]', space=smem, size = 0x4, offset = 0x4, fixed_abs, tag = 'smem constant byte address 0x4 - core index']
  #allocation1 [shape = 'u32[144,128]{1,0:T(1,128)}', space=vmem, size = 0x12000, scoped, tag = 'internal scratch']
  %s0 = inlined_call_operand.hbm [shape: f32[16,128], index: 0, kind: input, shape index: {}]
  %s1 = inlined_call_operand.hbm [shape: f32[16,128], index: 1, kind: input, shape index: {}]
  %s2 = inlined_call_operand.hbm [shape: f32[8,128], index: 2, kind: output, shape index: {}]
  %s3 = sld [smem:[#allocation0]]
  $region30: #{tpu_custom_call.1} parent=0
    _
  %s5 = ssub.s32 1, %s3
  %s6 = scalar_select 0, %s5, %s3
  $region1: #{tpu_custom_call.1} parent=0
    #allocation2 [shape = 'u8[8192]{0}', space=vmem, size = 0x2000, scoped, tag = 'input window, operand 0, single buffered']
    #allocation3 [shape = 's32[1]{0}', space=sflag, size = 0x4, scoped, tag = 'scoped memory for tpu_custom_call.1']
    #allocation4 [shape = 's32[1]{0}', space=sflag, size = 0x4, scoped, tag = 'scoped memory for tpu_custom_call.1']
    #allocation5 [shape = 'u8[8192]{0}', space=vmem, size = 0x2000, scoped, tag = 'input window, operand 1, single buffered']
    #allocation6 [shape = 's32[1]{0}', space=sflag, size = 0x4, scoped, tag = 'scoped memory for tpu_custom_call.1']
    #allocation7 [shape = 'u8[4096]{0}', space=vmem, size = 0x1000, scoped, tag = 'output window, operand 0, single buffered']
    %7 = vsyncpa [#allocation3], 0
    %8 = vsyncpa [#allocation6], 0
    %9 = vsyncpa [#allocation4], 0
    // Predicated region
    $region2: #{tpu_custom_call.1} parent=1 // pred_check
      _
    $region3: #{tpu_custom_call.1} parent=1 // pred_check_branch
      %11 = sbr.rel (0) target = $region5
    $region4: #{tpu_custom_call.1} parent=1 // pred_region
      %s12 = sadd.s32 0, 0
      %p13 = scmp.lt.s32.totalorder %s12, 0
      %s14 = scalar_select %p13, %s12, 0
      %s15 = smul.u32 2, %s14
      %s17 = ssub.s32 256, 256
      %18 = vsyncadd [#allocation3], %s17
      %s19 = smul.addr %s15, 128
      %s20 = scalar_lea.hbm %s0, %s19
      %s21 = sshll.u32 [#allocation2], 4
      %s22 = int_to_ptr.vmem [resolvable:$true] %s21
      %27 = dma.hbm_to_vmem [thread:$0]  %s20, 256, %s22, [#allocation3], 128, 128, 8
    $region5: #{tpu_custom_call.1} parent=1 // pred_fallthru
      _
    // Predicated region
    $region6: #{tpu_custom_call.1} parent=1 // pred_check
      _
    $region7: #{tpu_custom_call.1} parent=1 // pred_check_branch
      %29 = sbr.rel (0) target = $region9
    $region8: #{tpu_custom_call.1} parent=1 // pred_region
      %s30 = sadd.s32 0, 0
      %p31 = scmp.lt.s32.totalorder %s30, 0
      %s32 = scalar_select %p31, %s30, 0
      %s33 = smul.u32 2, %s32
      %s35 = ssub.s32 256, 256
      %36 = vsyncadd [#allocation6], %s35
      %s37 = smul.addr %s33, 128
      %s38 = scalar_lea.hbm %s1, %s37
      %s39 = sshll.u32 [#allocation5], 4
      %s40 = int_to_ptr.vmem [resolvable:$true] %s39
      %45 = dma.hbm_to_vmem [thread:$0]  %s38, 256, %s40, [#allocation6], 128, 128, 8
    $region9: #{tpu_custom_call.1} parent=1 // pred_fallthru
      _
    // Predicated region
    $region10: #{tpu_custom_call.1} parent=1 // pred_check
      _
    $region11: #{tpu_custom_call.1} parent=1 // pred_check_branch
      %47 = sbr.rel (0) target = $region13
    $region12: #{tpu_custom_call.1} parent=1 // pred_region
      %48 = dma.done [#allocation3], 256
    $region13: #{tpu_custom_call.1} parent=1 // pred_fallthru
      _
    // Predicated region
    $region14: #{tpu_custom_call.1} parent=1 // pred_check
      _
    $region15: #{tpu_custom_call.1} parent=1 // pred_check_branch
      %50 = sbr.rel (0) target = $region17
    $region16: #{tpu_custom_call.1} parent=1 // pred_region
      %51 = dma.done [#allocation6], 256
    $region17: #{tpu_custom_call.1} parent=1 // pred_fallthru
      _
    %s52 = sadd.s32 0, 0
    %p53 = scmp.lt.s32.totalorder %s52, 0
    %s54 = scalar_select %p53, %s52, 0
    %s55 = smul.u32 2, %s54
    %s56 = sadd.s32 0, 0
    %p57 = scmp.lt.s32.totalorder %s56, 0
    %s58 = scalar_select %p57, %s56, 0
    %s59 = smul.u32 2, %s58
    %p60 = scmp.eq.s32.totalorder 0, 0
    // Predicated region
    $region18: #{tpu_custom_call.1} parent=1 // pred_check
      %p61 = pneg %p60
    $region19: #{tpu_custom_call.1} parent=1 // pred_check_branch
      %63 = sbr.rel (%p61) target = $region21
    $region20: #{tpu_custom_call.1} parent=1 // pred_region
      %64 = vst [vmem:[#allocation7] sm:$0xff] 0.0
    $region21: #{tpu_custom_call.1} parent=1 // pred_fallthru
      _
    %v65 = vld [vmem:[#allocation2] sm:$0xff]
    %v66 = vld [vmem:[#allocation2 + $0x8] sm:$0xff]
    %v67 = vld [vmem:[#allocation5] sm:$0xff]
    %v68 = vld [vmem:[#allocation5 + $0x8] sm:$0xff]
    %v69 = vsub.f32 %v65, %v67
    %v70 = vsub.f32 %v66, %v68
    %v71 = vmul.f32 %v69, %v69
    %v72 = vmul.f32 %v70, %v70
    %v73 = vld [vmem:[#allocation7] sm:$0xff]
    %v74 = vadd.f32 %v71, %v72
    %v75 = vadd.f32 %v73, %v74
    %76 = vst [vmem:[#allocation7] sm:$0xff] %v75
    // Predicated region
    $region22: #{tpu_custom_call.1} parent=1 // pred_check
      _
    $region23: #{tpu_custom_call.1} parent=1 // pred_check_branch
      %78 = sbr.rel (0) target = $region25
    $region24: #{tpu_custom_call.1} parent=1 // pred_region
      %s80 = ssub.s32 128, 128
      %81 = vsyncadd [#allocation4], %s80
      %s83 = sshll.u32 [#allocation7], 4
      %s84 = int_to_ptr.vmem [resolvable:$true] %s83
      %86 = dma.vmem_to_hbm [thread:$0]  %s84, 128, %s2, [#allocation4]
    $region25: #{tpu_custom_call.1} parent=1 // pred_fallthru
      _
    // Predicated region
    $region26: #{tpu_custom_call.1} parent=1 // pred_check
      _
    $region27: #{tpu_custom_call.1} parent=1 // pred_check_branch
      %88 = sbr.rel (0) target = $region29
    $region28: #{tpu_custom_call.1} parent=1 // pred_region
      %89 = dma.done [#allocation4], 128
    $region29: #{tpu_custom_call.1} parent=1 // pred_fallthru
      _
    %90 = vsyncpa [#allocation3], 1
    %91 = vsyncpa [#allocation6], 1
    %92 = vsyncpa [#allocation4], 1

</llo_original>
